<compile_context>
chip_gen: v7x
topology: tpu7x:2x2x1
jax: 0.10.0
libtpu: 0.0.40
codegen_flags: <defaults>
</compile_context>

<pallas_src>
import functools

import jax
import jax.numpy as jnp
from jax.experimental import pallas as pl
from jax.experimental.pallas import tpu as pltpu

IN_DIM = 28 * 28          # 784
HID_DIM = 256
OUT_DIM = 10
OUT_PAD = 128             # lane-dense padded output width


def _round_up(x, m):
    return ((x + m - 1) // m) * m


def mlp_kernel(x_ref, w1_ref, b1_ref, w2_ref, b2_ref, o_ref):
    # x_ref:  (TILE_B, 784) f32      w1_ref: (784, 256) bf16   b1_ref: (1, 256) f32
    # w2_ref: (256, 128) bf16 (cols >= 10 are zero)             b2_ref: (1, 128) f32
    # o_ref:  (TILE_B, 128) f32
    #
    # Cast the streamed f32 batch tile to bf16 in-kernel to feed the MXU; this
    # replaces a separate wrapper-side cast pass over x in HBM.
    x = x_ref[...].astype(jnp.bfloat16)
    # Layer 1: bf16 x bf16 -> f32 accumulate on the MXU, f32 bias + ReLU on VPU.
    h = jnp.dot(x, w1_ref[...], preferred_element_type=jnp.float32)
    h = jnp.maximum(h + b1_ref[...], 0.0)
    # Layer 2: cast hidden back to bf16 for the MXU, accumulate in f32.
    out = jnp.dot(h.astype(jnp.bfloat16), w2_ref[...],
                  preferred_element_type=jnp.float32)
    o_ref[...] = (out + b2_ref[...]).astype(o_ref.dtype)


def prepare_params(w1, b1, w2, b2):
    """One-time weight prep (hoisted out of the forward path).

    Weights are stored as (in_features, out_features). Casts layer weights to
    bf16 and zero-pads layer 2 to a lane-dense 128-wide output block.
    """
    w1_bf = w1.astype(jnp.bfloat16)
    b1_2d = b1.reshape(1, HID_DIM).astype(jnp.float32)
    w2_pad = jnp.zeros((HID_DIM, OUT_PAD), jnp.bfloat16)
    w2_pad = w2_pad.at[:, :OUT_DIM].set(w2.astype(jnp.bfloat16))
    b2_pad = jnp.zeros((1, OUT_PAD), jnp.float32)
    b2_pad = b2_pad.at[0, :OUT_DIM].set(b2.astype(jnp.float32))
    return w1_bf, b1_2d, w2_pad, b2_pad


def _pick_tile(B, tile_b):
    # Sublane-friendly tiles (multiple of 16 for bf16 packing of intermediates).
    tb = min(tile_b, _round_up(B, 16))
    # v7x megacore: keep >= 4 grid steps when the batch is big enough so the
    # "parallel" batch axis is actually sharded across both TensorCores.
    if B >= 1024:
        tb = min(tb, _round_up(pl.cdiv(B, 4), 16))
    return max(tb, 16)


@functools.partial(jax.jit, static_argnames=("tile_b",))
def mnist_mlp_forward(x_nchw, w1_bf, b1_2d, w2_pad, b2_pad, *, tile_b=1024):
    """x_nchw: (B, 1, 28, 28) float32 -> logits (B, 10) float32.

    Takes pre-prepared weights from prepare_params().
    """
    B = x_nchw.shape[0]
    x2d = x_nchw.reshape(B, IN_DIM)          # stays f32; cast happens in-kernel

    tb = _pick_tile(B, tile_b)
    B_pad = _round_up(B, tb)
    if B_pad != B:
        x2d = jnp.pad(x2d, ((0, B_pad - B), (0, 0)))

    grid = (B_pad // tb,)
    out = pl.pallas_call(
        mlp_kernel,
        out_shape=jax.ShapeDtypeStruct((B_pad, OUT_PAD), jnp.float32),
        grid=grid,
        in_specs=[
            # Streamed f32 batch tile (double-buffered by the Pallas pipeline).
            pl.BlockSpec((tb, IN_DIM), lambda i: (i, 0)),
            # Weights/biases: constant index_map -> resident in VMEM.
            pl.BlockSpec((IN_DIM, HID_DIM), lambda i: (0, 0)),
            pl.BlockSpec((1, HID_DIM), lambda i: (0, 0)),
            pl.BlockSpec((HID_DIM, OUT_PAD), lambda i: (0, 0)),
            pl.BlockSpec((1, OUT_PAD), lambda i: (0, 0)),
        ],
        out_specs=pl.BlockSpec((tb, OUT_PAD), lambda i: (i, 0)),
        compiler_params=pltpu.CompilerParams(
            dimension_semantics=("parallel",),
            # Headroom for large f32 input tiles (v5e scoped default is 16 MiB);
            # still well under v7x's 64 MiB physical VMEM.
            vmem_limit_bytes=48 * 1024 * 1024,
        ),
    )(x2d, w1_bf, b1_2d, w2_pad, b2_pad)

    # Padded batch rows and padded output lanes are sliced off inside the jit.
    return out[:B, :OUT_DIM]


def init_params(key):
    """Deterministic parameter init matching nn.Linear shapes.

    PyTorch nn.Linear(in, out) has weight (out, in), bias (out,), init
    U(-1/sqrt(in), 1/sqrt(in)). We store weights transposed as (in, out)."""
    k1, k2, k3, k4 = jax.random.split(key, 4)
    lim1 = 1.0 / IN_DIM ** 0.5
    lim2 = 1.0 / HID_DIM ** 0.5
    w1 = jax.random.uniform(k1, (IN_DIM, HID_DIM), jnp.float32, -lim1, lim1)
    b1 = jax.random.uniform(k2, (HID_DIM,), jnp.float32, -lim1, lim1)
    w2 = jax.random.uniform(k3, (HID_DIM, OUT_DIM), jnp.float32, -lim2, lim2)
    b2 = jax.random.uniform(k4, (OUT_DIM,), jnp.float32, -lim2, lim2)
    return w1, b1, w2, b2


def _reference(x_nchw, w1, b1, w2, b2):
    """Pure-JAX reference with the same bf16-input / f32-accumulate recipe."""
    B = x_nchw.shape[0]
    x2d = x_nchw.reshape(B, IN_DIM).astype(jnp.bfloat16).astype(jnp.float32)
    w1f = w1.astype(jnp.bfloat16).astype(jnp.float32)
    w2f = w2.astype(jnp.bfloat16).astype(jnp.float32)
    h = jnp.maximum(x2d @ w1f + b1, 0.0)
    h = h.astype(jnp.bfloat16).astype(jnp.float32)
    return h @ w2f + b2


if __name__ == "__main__":
    key = jax.random.PRNGKey(0)
    k_params, k_x1, k_x2 = jax.random.split(key, 3)

    w1, b1, w2, b2 = init_params(k_params)
    # One-time weight prep (bf16 cast + 128-lane padding), outside the fwd path.
    w1_bf, b1_2d, w2_pad, b2_pad = prepare_params(w1, b1, w2, b2)

    # Small batch of MNIST-shaped inputs, NCHW like PyTorch.
    B = 8
    x = jax.random.normal(k_x1, (B, 1, 28, 28), jnp.float32)
    logits = jax.block_until_ready(
        mnist_mlp_forward(x, w1_bf, b1_2d, w2_pad, b2_pad))
    assert logits.shape == (B, OUT_DIM)
    ref = _reference(x, w1, b1, w2, b2)
    assert jnp.allclose(logits, ref, atol=5e-3, rtol=5e-3)

    # Larger, non-tile-aligned batch to exercise the multi-step grid + padding
    # path (4 grid steps -> both TensorCores on v7x).
    B2 = 1000
    x2 = jax.random.normal(k_x2, (B2, 1, 28, 28), jnp.float32)
    logits2 = jax.block_until_ready(
        mnist_mlp_forward(x2, w1_bf, b1_2d, w2_pad, b2_pad, tile_b=1024))
    assert logits2.shape == (B2, OUT_DIM)
    ref2 = _reference(x2, w1, b1, w2, b2)
    assert jnp.allclose(logits2, ref2, atol=5e-3, rtol=5e-3)

    print("KERNEL_OK")
</pallas_src>

<mosaic_0001>
module attributes {stable_mosaic.version = 11 : i64} {
  func.func @mlp_kernel(%arg0: i32, %arg1: memref<16x784xf32, #tpu.memory_space<vmem>>, %arg2: memref<784x256xbf16, #tpu.memory_space<vmem>>, %arg3: memref<1x256xf32, #tpu.memory_space<vmem>>, %arg4: memref<256x128xbf16, #tpu.memory_space<vmem>>, %arg5: memref<1x128xf32, #tpu.memory_space<vmem>>, %arg6: memref<16x128xf32, #tpu.memory_space<vmem>>) attributes {dimension_semantics = [#tpu.dimension_semantics<parallel>], iteration_bounds = array<i64: 1>, scalar_prefetch = 0 : i64, scratch_operands = 0 : i64, tpu.core_type = #tpu.core_type<tc>, window_params = [{transform_indices = @transform_0, window_bounds = array<i64: 16, 784>}, {pipeline_mode = #tpu.pipeline_mode<synchronous>, transform_indices = @transform_1, window_bounds = array<i64: 784, 256>}, {pipeline_mode = #tpu.pipeline_mode<synchronous>, transform_indices = @transform_2, window_bounds = array<i64: 1, 256>}, {pipeline_mode = #tpu.pipeline_mode<synchronous>, transform_indices = @transform_3, window_bounds = array<i64: 256, 128>}, {pipeline_mode = #tpu.pipeline_mode<synchronous>, transform_indices = @transform_4, window_bounds = array<i64: 1, 128>}, {transform_indices = @transform_5, window_bounds = array<i64: 16, 128>}]} {
    %c0 = arith.constant 0 : index
    %c0_0 = arith.constant 0 : index
    %0 = vector.load %arg1[%c0, %c0_0] : memref<16x784xf32, #tpu.memory_space<vmem>>, vector<16x784xf32>
    %1 = arith.truncf %0 : vector<16x784xf32> to vector<16x784xbf16>
    %c0_1 = arith.constant 0 : index
    %c0_2 = arith.constant 0 : index
    %2 = vector.load %arg2[%c0_1, %c0_2] : memref<784x256xbf16, #tpu.memory_space<vmem>>, vector<784x256xbf16>
    %cst = arith.constant dense<0.000000e+00> : vector<16x256xf32>
    %3 = tpu.matmul %1, %2, %cst {dimension_numbers = #tpu.dot_dimension_numbers<[1], [0], [0], [1], [0, 0, 1, 1], [], []>} : vector<16x784xbf16>, vector<784x256xbf16>, vector<16x256xf32> -> vector<16x256xf32>
    %c0_3 = arith.constant 0 : index
    %c0_4 = arith.constant 0 : index
    %4 = vector.load %arg3[%c0_3, %c0_4] : memref<1x256xf32, #tpu.memory_space<vmem>>, vector<1x256xf32>
    %5 = vector.broadcast %4 : vector<1x256xf32> to vector<16x256xf32>
    %6 = arith.addf %3, %5 : vector<16x256xf32>
    %cst_5 = arith.constant 0.000000e+00 : f32
    %7 = vector.broadcast %cst_5 : f32 to vector<16x256xf32>
    %8 = arith.maximumf %6, %7 : vector<16x256xf32>
    %9 = arith.truncf %8 : vector<16x256xf32> to vector<16x256xbf16>
    %c0_6 = arith.constant 0 : index
    %c0_7 = arith.constant 0 : index
    %10 = vector.load %arg4[%c0_6, %c0_7] : memref<256x128xbf16, #tpu.memory_space<vmem>>, vector<256x128xbf16>
    %cst_8 = arith.constant dense<0.000000e+00> : vector<16x128xf32>
    %11 = tpu.matmul %9, %10, %cst_8 {dimension_numbers = #tpu.dot_dimension_numbers<[1], [0], [0], [1], [0, 0, 1, 1], [], []>} : vector<16x256xbf16>, vector<256x128xbf16>, vector<16x128xf32> -> vector<16x128xf32>
    %c0_9 = arith.constant 0 : index
    %c0_10 = arith.constant 0 : index
    %12 = vector.load %arg5[%c0_9, %c0_10] : memref<1x128xf32, #tpu.memory_space<vmem>>, vector<1x128xf32>
    %13 = vector.broadcast %12 : vector<1x128xf32> to vector<16x128xf32>
    %14 = arith.addf %11, %13 : vector<16x128xf32>
    %c0_11 = arith.constant 0 : index
    %c0_12 = arith.constant 0 : index
    %15 = vector.load %arg6[%c0_11, %c0_12] : memref<16x128xf32, #tpu.memory_space<vmem>>, vector<16x128xf32>
    tpu.vector_store %arg6[%c0_11, %c0_12], %14 {strides = array<i32>} : memref<16x128xf32, #tpu.memory_space<vmem>>, vector<16x128xf32>,
    return
  }
  func.func @transform_0(%arg0: i32) -> (i32, i32) {
    %c0_i32 = arith.constant 0 : i32
    %c0_i32_0 = arith.constant 0 : i32
    return %arg0, %c0_i32 : i32, i32
  }
  func.func @transform_1(%arg0: i32) -> (i32, i32) {
    %c0_i32 = arith.constant 0 : i32
    %c0_i32_0 = arith.constant 0 : i32
    %c0_i32_1 = arith.constant 0 : i32
    return %c0_i32, %c0_i32_0 : i32, i32
  }
  func.func @transform_2(%arg0: i32) -> (i32, i32) {
    %c0_i32 = arith.constant 0 : i32
    %c0_i32_0 = arith.constant 0 : i32
    %c0_i32_1 = arith.constant 0 : i32
    return %c0_i32, %c0_i32_0 : i32, i32
  }
  func.func @transform_3(%arg0: i32) -> (i32, i32) {
    %c0_i32 = arith.constant 0 : i32
    %c0_i32_0 = arith.constant 0 : i32
    %c0_i32_1 = arith.constant 0 : i32
    return %c0_i32, %c0_i32_0 : i32, i32
  }
  func.func @transform_4(%arg0: i32) -> (i32, i32) {
    %c0_i32 = arith.constant 0 : i32
    %c0_i32_0 = arith.constant 0 : i32
    %c0_i32_1 = arith.constant 0 : i32
    return %c0_i32, %c0_i32_0 : i32, i32
  }
  func.func @transform_5(%arg0: i32) -> (i32, i32) {
    %c0_i32 = arith.constant 0 : i32
    %c0_i32_0 = arith.constant 0 : i32
    return %arg0, %c0_i32 : i32, i32
  }
}

</mosaic_0001>

<llo_original>
// kernel: mnist_mlp_forward.1
$region0: #{mnist_mlp_forward.1}
  #allocation0 [shape = 'u32[]', space=smem, size = 0x4, offset = 0x4, fixed_abs, tag = 'smem constant byte address 0x4 - core index']
  #allocation1 [shape = 'u32[144,128]{1,0:T(1,128)}', space=vmem, size = 0x12000, scoped, tag = 'internal scratch']
  %s0 = inlined_call_operand.vmem [shape: f32[16,784], index: 0, kind: input, shape index: {}]
  %s1 = inlined_call_operand.vmem [shape: bf16[784,256], index: 1, kind: input, shape index: {}]
  %s2 = inlined_call_operand.vmem [shape: f32[1,256], index: 2, kind: input, shape index: {}]
  %s3 = inlined_call_operand.vmem [shape: bf16[256,128], index: 3, kind: input, shape index: {}]
  %s4 = inlined_call_operand.vmem [shape: f32[1,128], index: 4, kind: input, shape index: {}]
  %s5 = inlined_call_operand.vmem [shape: f32[16,128], index: 5, kind: output, shape index: {}]
  %s6 = sld [smem:[#allocation0]]
  $region30: #{mnist_mlp_forward.1} parent=0
    _
  %s8 = ssub.s32 1, %s6
  %s9 = scalar_select 0, %s8, %s6
  // Predicated region
  $region2: #{mnist_mlp_forward.1} parent=0 // pred_check
    _
  $region3: #{mnist_mlp_forward.1} parent=0 // pred_check_branch
    %11 = sbr.rel (0) target = $region5
  $region4: #{mnist_mlp_forward.1} parent=0 // pred_region
    _
  $region5: #{mnist_mlp_forward.1} parent=0 // pred_fallthru
    _
  // Predicated region
  $region6: #{mnist_mlp_forward.1} parent=0 // pred_check
    _
  $region7: #{mnist_mlp_forward.1} parent=0 // pred_check_branch
    %13 = sbr.rel (0) target = $region9
  $region8: #{mnist_mlp_forward.1} parent=0 // pred_region
    _
  $region9: #{mnist_mlp_forward.1} parent=0 // pred_fallthru
    _
  // Predicated region
  $region10: #{mnist_mlp_forward.1} parent=0 // pred_check
    _
  $region11: #{mnist_mlp_forward.1} parent=0 // pred_check_branch
    %15 = sbr.rel (0) target = $region13
  $region12: #{mnist_mlp_forward.1} parent=0 // pred_region
    _
  $region13: #{mnist_mlp_forward.1} parent=0 // pred_fallthru
    _
  // Predicated region
  $region14: #{mnist_mlp_forward.1} parent=0 // pred_check
    _
  $region15: #{mnist_mlp_forward.1} parent=0 // pred_check_branch
    %17 = sbr.rel (0) target = $region17
  $region16: #{mnist_mlp_forward.1} parent=0 // pred_region
    _
  $region17: #{mnist_mlp_forward.1} parent=0 // pred_fallthru
    _
  // Predicated region
  $region18: #{mnist_mlp_forward.1} parent=0 // pred_check
    _
  $region19: #{mnist_mlp_forward.1} parent=0 // pred_check_branch
    %19 = sbr.rel (0) target = $region21
  $region20: #{mnist_mlp_forward.1} parent=0 // pred_region
    _
  $region21: #{mnist_mlp_forward.1} parent=0 // pred_fallthru
    _
  %v21 = vld [vmem:[%s0] sm:$0xff]
  %v22 = vld [vmem:[%s0 + $0x8] sm:$0xff]
  %v23 = vld [vmem:[%s0 + $0x10] sm:$0xff]
  %v24 = vld [vmem:[%s0 + $0x18] sm:$0xff]
  %v25 = vld [vmem:[%s0 + $0x20] sm:$0xff]
  %v26 = vld [vmem:[%s0 + $0x28] sm:$0xff]
  %v27 = vld [vmem:[%s0 + $0x30] sm:$0xff]
  %v28 = vld [vmem:[%s0 + $0x38] sm:$0xff]
  %v29 = vld [vmem:[%s0 + $0x40] sm:$0xff]
  %v30 = vld [vmem:[%s0 + $0x48] sm:$0xff]
  %v31 = vld [vmem:[%s0 + $0x50] sm:$0xff]
  %v32 = vld [vmem:[%s0 + $0x58] sm:$0xff]
  %v33 = vld [vmem:[%s0 + $0x60] sm:$0xff]
  %v34 = vld [vmem:[%s0 + $0x68] sm:$0xff]
  %v35 = vpack.c.bf16 %v28, %v21
  %v36 = vpack.c.bf16 %v29, %v22
  %v37 = vpack.c.bf16 %v30, %v23
  %v38 = vpack.c.bf16 %v31, %v24
  %v39 = vpack.c.bf16 %v32, %v25
  %v40 = vpack.c.bf16 %v33, %v26
  %v41 = vpack.c.bf16 %v34, %v27
  %v42 = vld [vmem:[%s1] sm:$0xff]
  %v43 = vld [vmem:[%s1 + $0x8] sm:$0xff]
  %v44 = vld [vmem:[%s1 + $0x10] sm:$0xff]
  %v45 = vld [vmem:[%s1 + $0x18] sm:$0xff]
  %v46 = vld [vmem:[%s1 + $0x20] sm:$0xff]
  %v47 = vld [vmem:[%s1 + $0x28] sm:$0xff]
  %v48 = vld [vmem:[%s1 + $0x30] sm:$0xff]
  %v49 = vld [vmem:[%s1 + $0x38] sm:$0xff]
  %v50 = vld [vmem:[%s1 + $0x40] sm:$0xff]
  %v51 = vld [vmem:[%s1 + $0x48] sm:$0xff]
  %v52 = vld [vmem:[%s1 + $0x50] sm:$0xff]
  %v53 = vld [vmem:[%s1 + $0x58] sm:$0xff]
  %v54 = vld [vmem:[%s1 + $0x60] sm:$0xff]
  %v55 = vld [vmem:[%s1 + $0x68] sm:$0xff]
  %v56 = vld [vmem:[%s1 + $0x70] sm:$0xff]
  %v57 = vld [vmem:[%s1 + $0x78] sm:$0xff]
  %v58 = vld [vmem:[%s1 + $0x80] sm:$0xff]
  %v59 = vld [vmem:[%s1 + $0x88] sm:$0xff]
  %v60 = vld [vmem:[%s1 + $0x90] sm:$0xff]
  %v61 = vld [vmem:[%s1 + $0x98] sm:$0xff]
  %v62 = vld [vmem:[%s1 + $0xa0] sm:$0xff]
  %v63 = vld [vmem:[%s1 + $0xa8] sm:$0xff]
  %v64 = vld [vmem:[%s1 + $0xb0] sm:$0xff]
  %v65 = vld [vmem:[%s1 + $0xb8] sm:$0xff]
  %v66 = vld [vmem:[%s1 + $0xc0] sm:$0xff]
  %v67 = vld [vmem:[%s1 + $0xc8] sm:$0xff]
  %v68 = vld [vmem:[%s1 + $0xd0] sm:$0xff]
  %v69 = vld [vmem:[%s1 + $0xd8] sm:$0xff]
  %v70 = vld [vmem:[%s1 + $0xe0] sm:$0xff]
  %v71 = vld [vmem:[%s1 + $0xe8] sm:$0xff]
  %v72 = vld [vmem:[%s1 + $0xf0] sm:$0xff]
  %v73 = vld [vmem:[%s1 + $0xf8] sm:$0xff]
  %v74 = vld [vmem:[%s1 + $0x100] sm:$0xff]
  %v75 = vld [vmem:[%s1 + $0x108] sm:$0xff]
  %v76 = vld [vmem:[%s1 + $0x110] sm:$0xff]
  %v77 = vld [vmem:[%s1 + $0x118] sm:$0xff]
  %v78 = vld [vmem:[%s1 + $0x120] sm:$0xff]
  %v79 = vld [vmem:[%s1 + $0x128] sm:$0xff]
  %v80 = vld [vmem:[%s1 + $0x130] sm:$0xff]
  %v81 = vld [vmem:[%s1 + $0x138] sm:$0xff]
  %v82 = vld [vmem:[%s1 + $0x140] sm:$0xff]
  %v83 = vld [vmem:[%s1 + $0x148] sm:$0xff]
  %v84 = vld [vmem:[%s1 + $0x150] sm:$0xff]
  %v85 = vld [vmem:[%s1 + $0x158] sm:$0xff]
  %v86 = vld [vmem:[%s1 + $0x160] sm:$0xff]
  %v87 = vld [vmem:[%s1 + $0x168] sm:$0xff]
  %v88 = vld [vmem:[%s1 + $0x170] sm:$0xff]
  %v89 = vld [vmem:[%s1 + $0x178] sm:$0xff]
  %v90 = vld [vmem:[%s1 + $0x180] sm:$0xff]
  %v91 = vld [vmem:[%s1 + $0x188] sm:$0xff]
  %v92 = vld [vmem:[%s1 + $0x190] sm:$0xff]
  %v93 = vld [vmem:[%s1 + $0x198] sm:$0xff]
  %v94 = vld [vmem:[%s1 + $0x1a0] sm:$0xff]
  %v95 = vld [vmem:[%s1 + $0x1a8] sm:$0xff]
  %v96 = vld [vmem:[%s1 + $0x1b0] sm:$0xff]
  %v97 = vld [vmem:[%s1 + $0x1b8] sm:$0xff]
  %v98 = vld [vmem:[%s1 + $0x1c0] sm:$0xff]
  %v99 = vld [vmem:[%s1 + $0x1c8] sm:$0xff]
  %v100 = vld [vmem:[%s1 + $0x1d0] sm:$0xff]
  %v101 = vld [vmem:[%s1 + $0x1d8] sm:$0xff]
  %v102 = vld [vmem:[%s1 + $0x1e0] sm:$0xff]
  %v103 = vld [vmem:[%s1 + $0x1e8] sm:$0xff]
  %v104 = vld [vmem:[%s1 + $0x1f0] sm:$0xff]
  %v105 = vld [vmem:[%s1 + $0x1f8] sm:$0xff]
  %v106 = vld [vmem:[%s1 + $0x200] sm:$0xff]
  %v107 = vld [vmem:[%s1 + $0x208] sm:$0xff]
  %v108 = vld [vmem:[%s1 + $0x210] sm:$0xff]
  %v109 = vld [vmem:[%s1 + $0x218] sm:$0xff]
  %v110 = vld [vmem:[%s1 + $0x220] sm:$0xff]
  %v111 = vld [vmem:[%s1 + $0x228] sm:$0xff]
  %v112 = vld [vmem:[%s1 + $0x230] sm:$0xff]
  %v113 = vld [vmem:[%s1 + $0x238] sm:$0xff]
  %v114 = vld [vmem:[%s1 + $0x240] sm:$0xff]
  %v115 = vld [vmem:[%s1 + $0x248] sm:$0xff]
  %v116 = vld [vmem:[%s1 + $0x250] sm:$0xff]
  %v117 = vld [vmem:[%s1 + $0x258] sm:$0xff]
  %v118 = vld [vmem:[%s1 + $0x260] sm:$0xff]
  %v119 = vld [vmem:[%s1 + $0x268] sm:$0xff]
  %v120 = vld [vmem:[%s1 + $0x270] sm:$0xff]
  %v121 = vld [vmem:[%s1 + $0x278] sm:$0xff]
  %v122 = vld [vmem:[%s1 + $0x280] sm:$0xff]
  %v123 = vld [vmem:[%s1 + $0x288] sm:$0xff]
  %v124 = vld [vmem:[%s1 + $0x290] sm:$0xff]
  %v125 = vld [vmem:[%s1 + $0x298] sm:$0xff]
  %v126 = vld [vmem:[%s1 + $0x2a0] sm:$0xff]
  %v127 = vld [vmem:[%s1 + $0x2a8] sm:$0xff]
  %v128 = vld [vmem:[%s1 + $0x2b0] sm:$0xff]
  %v129 = vld [vmem:[%s1 + $0x2b8] sm:$0xff]
  %v130 = vld [vmem:[%s1 + $0x2c0] sm:$0xff]
  %v131 = vld [vmem:[%s1 + $0x2c8] sm:$0xff]
  %v132 = vld [vmem:[%s1 + $0x2d0] sm:$0xff]
  %v133 = vld [vmem:[%s1 + $0x2d8] sm:$0xff]
  %v134 = vld [vmem:[%s1 + $0x2e0] sm:$0xff]
  %v135 = vld [vmem:[%s1 + $0x2e8] sm:$0xff]
  %v136 = vld [vmem:[%s1 + $0x2f0] sm:$0xff]
  %v137 = vld [vmem:[%s1 + $0x2f8] sm:$0xff]
  %v138 = vld [vmem:[%s1 + $0x300] sm:$0xff]
  %v139 = vld [vmem:[%s1 + $0x308] sm:$0xff]
  %v140 = vld [vmem:[%s2] sm:$0x3]
  %v142 = vlaneseq
  %v143 = vshrl.u32 %v142, 7
  %v144 = vsub.s32 0, %v143
  %v145 = vrot.slane %v140, %v144
  %v146 = vlaneseq
  %v147 = vshrl.u32 %v146, 7
  %v148 = vsub.s32 1, %v147
  %v149 = vrot.slane %v140, %v148
  %v250 = vunpack.c.l.b16 %v42
  %v251 = vunpack.c.h.b16 %v42
  %v252 = vunpack.c.l.b16 %v43
  %v253 = vunpack.c.h.b16 %v43
  %v254 = vunpack.c.l.b16 %v44
  %v255 = vunpack.c.h.b16 %v44
  %v256 = vunpack.c.l.b16 %v45
  %v257 = vunpack.c.h.b16 %v45
  %v258 = vunpack.c.l.b16 %v46
  %v259 = vunpack.c.h.b16 %v46
  %v260 = vunpack.c.l.b16 %v47
  %v261 = vunpack.c.h.b16 %v47
  %v262 = vunpack.c.l.b16 %v48
  %v263 = vunpack.c.h.b16 %v48
  %v264 = vunpack.c.l.b16 %v49
  %v265 = vunpack.c.h.b16 %v49
  %v266 = vunpack.c.l.b16 %v50
  %v267 = vunpack.c.h.b16 %v50
  %v268 = vunpack.c.l.b16 %v51
  %v269 = vunpack.c.h.b16 %v51
  %v270 = vunpack.c.l.b16 %v52
  %v271 = vunpack.c.h.b16 %v52
  %v272 = vunpack.c.l.b16 %v53
  %v273 = vunpack.c.h.b16 %v53
  %v274 = vunpack.c.l.b16 %v54
  %v275 = vunpack.c.h.b16 %v54
  %v276 = vunpack.c.l.b16 %v55
  %v277 = vunpack.c.h.b16 %v55
  %v278 = vunpack.c.l.b16 %v56
  %v279 = vunpack.c.h.b16 %v56
  %v280 = vunpack.c.l.b16 %v57
  %v281 = vunpack.c.h.b16 %v57
  %v282 = vunpack.c.l.b16 %v58
  %v283 = vunpack.c.h.b16 %v58
  %v284 = vunpack.c.l.b16 %v59
  %v285 = vunpack.c.h.b16 %v59
  %v286 = vunpack.c.l.b16 %v60
  %v287 = vunpack.c.h.b16 %v60
  %v288 = vunpack.c.l.b16 %v61
  %v289 = vunpack.c.h.b16 %v61
  %v290 = vunpack.c.l.b16 %v62
  %v291 = vunpack.c.h.b16 %v62
  %v292 = vunpack.c.l.b16 %v63
  %v293 = vunpack.c.h.b16 %v63
  %v294 = vunpack.c.l.b16 %v64
  %v295 = vunpack.c.h.b16 %v64
  %v296 = vunpack.c.l.b16 %v65
  %v297 = vunpack.c.h.b16 %v65
  %v298 = vunpack.c.l.b16 %v66
  %v299 = vunpack.c.h.b16 %v66
  %v300 = vunpack.c.l.b16 %v67
  %v301 = vunpack.c.h.b16 %v67
  %v302 = vunpack.c.l.b16 %v68
  %v303 = vunpack.c.h.b16 %v68
  %v304 = vunpack.c.l.b16 %v69
  %v305 = vunpack.c.h.b16 %v69
  %v306 = vunpack.c.l.b16 %v70
  %v307 = vunpack.c.h.b16 %v70
  %v308 = vunpack.c.l.b16 %v71
  %v309 = vunpack.c.h.b16 %v71
  %v310 = vunpack.c.l.b16 %v72
  %v311 = vunpack.c.h.b16 %v72
  %v312 = vunpack.c.l.b16 %v73
  %v313 = vunpack.c.h.b16 %v73
  %v314 = vunpack.c.l.b16 %v74
  %v315 = vunpack.c.h.b16 %v74
  %v316 = vunpack.c.l.b16 %v75
  %v317 = vunpack.c.h.b16 %v75
  %v318 = vunpack.c.l.b16 %v76
  %v319 = vunpack.c.h.b16 %v76
  %v320 = vunpack.c.l.b16 %v77
  %v321 = vunpack.c.h.b16 %v77
  %v322 = vunpack.c.l.b16 %v78
  %v323 = vunpack.c.h.b16 %v78
  %v324 = vunpack.c.l.b16 %v79
  %v325 = vunpack.c.h.b16 %v79
  %v326 = vunpack.c.l.b16 %v80
  %v327 = vunpack.c.h.b16 %v80
  %v328 = vunpack.c.l.b16 %v81
  %v329 = vunpack.c.h.b16 %v81
  %v330 = vunpack.c.l.b16 %v82
  %v331 = vunpack.c.h.b16 %v82
  %v332 = vunpack.c.l.b16 %v83
  %v333 = vunpack.c.h.b16 %v83
  %v334 = vunpack.c.l.b16 %v84
  %v335 = vunpack.c.h.b16 %v84
  %v336 = vunpack.c.l.b16 %v85
  %v337 = vunpack.c.h.b16 %v85
  %v338 = vunpack.c.l.b16 %v86
  %v339 = vunpack.c.h.b16 %v86
  %v340 = vunpack.c.l.b16 %v87
  %v341 = vunpack.c.h.b16 %v87
  %v342 = vunpack.c.l.b16 %v88
  %v343 = vunpack.c.h.b16 %v88
  %v344 = vunpack.c.l.b16 %v89
  %v345 = vunpack.c.h.b16 %v89
  %v346 = vunpack.c.l.b16 %v90
  %v347 = vunpack.c.h.b16 %v90
  %v348 = vunpack.c.l.b16 %v91
  %v349 = vunpack.c.h.b16 %v91
  %v350 = vunpack.c.l.b16 %v92
  %v351 = vunpack.c.h.b16 %v92
  %v352 = vunpack.c.l.b16 %v93
  %v353 = vunpack.c.h.b16 %v93
  %v354 = vunpack.c.l.b16 %v94
  %v355 = vunpack.c.h.b16 %v94
  %v356 = vunpack.c.l.b16 %v95
  %v357 = vunpack.c.h.b16 %v95
  %v358 = vunpack.c.l.b16 %v96
  %v359 = vunpack.c.h.b16 %v96
  %v360 = vunpack.c.l.b16 %v97
  %v361 = vunpack.c.h.b16 %v97
  %v362 = vunpack.c.l.b16 %v98
  %v363 = vunpack.c.h.b16 %v98
  %v364 = vunpack.c.l.b16 %v99
  %v365 = vunpack.c.h.b16 %v99
  %v366 = vunpack.c.l.b16 %v100
  %v367 = vunpack.c.h.b16 %v100
  %v368 = vunpack.c.l.b16 %v101
  %v369 = vunpack.c.h.b16 %v101
  %v370 = vunpack.c.l.b16 %v102
  %v371 = vunpack.c.h.b16 %v102
  %v372 = vunpack.c.l.b16 %v103
  %v373 = vunpack.c.h.b16 %v103
  %v374 = vunpack.c.l.b16 %v104
  %v375 = vunpack.c.h.b16 %v104
  %v376 = vunpack.c.l.b16 %v105
  %v377 = vunpack.c.h.b16 %v105
  %v378 = vunpack.c.l.b16 %v106
  %v379 = vunpack.c.h.b16 %v106
  %v380 = vunpack.c.l.b16 %v107
  %v381 = vunpack.c.h.b16 %v107
  %v382 = vunpack.c.l.b16 %v108
  %v383 = vunpack.c.h.b16 %v108
  %v384 = vunpack.c.l.b16 %v109
  %v385 = vunpack.c.h.b16 %v109
  %v386 = vunpack.c.l.b16 %v110
  %v387 = vunpack.c.h.b16 %v110
  %v388 = vunpack.c.l.b16 %v111
  %v389 = vunpack.c.h.b16 %v111
  %v390 = vunpack.c.l.b16 %v112
  %v391 = vunpack.c.h.b16 %v112
  %v392 = vunpack.c.l.b16 %v113
  %v393 = vunpack.c.h.b16 %v113
  %v394 = vunpack.c.l.b16 %v114
  %v395 = vunpack.c.h.b16 %v114
  %v396 = vunpack.c.l.b16 %v115
  %v397 = vunpack.c.h.b16 %v115
  %v398 = vunpack.c.l.b16 %v116
  %v399 = vunpack.c.h.b16 %v116
  %v400 = vunpack.c.l.b16 %v117
  %v401 = vunpack.c.h.b16 %v117
  %v402 = vunpack.c.l.b16 %v118
  %v403 = vunpack.c.h.b16 %v118
  %v404 = vunpack.c.l.b16 %v119
  %v405 = vunpack.c.h.b16 %v119
  %v406 = vunpack.c.l.b16 %v120
  %v407 = vunpack.c.h.b16 %v120
  %v408 = vunpack.c.l.b16 %v121
  %v409 = vunpack.c.h.b16 %v121
  %v410 = vunpack.c.l.b16 %v122
  %v411 = vunpack.c.h.b16 %v122
  %v412 = vunpack.c.l.b16 %v123
  %v413 = vunpack.c.h.b16 %v123
  %v414 = vunpack.c.l.b16 %v124
  %v415 = vunpack.c.h.b16 %v124
  %v416 = vunpack.c.l.b16 %v125
  %v417 = vunpack.c.h.b16 %v125
  %v418 = vunpack.c.l.b16 %v126
  %v419 = vunpack.c.h.b16 %v126
  %v420 = vunpack.c.l.b16 %v127
  %v421 = vunpack.c.h.b16 %v127
  %v422 = vunpack.c.l.b16 %v128
  %v423 = vunpack.c.h.b16 %v128
  %v424 = vunpack.c.l.b16 %v129
  %v425 = vunpack.c.h.b16 %v129
  %v426 = vunpack.c.l.b16 %v130
  %v427 = vunpack.c.h.b16 %v130
  %v428 = vunpack.c.l.b16 %v131
  %v429 = vunpack.c.h.b16 %v131
  %v430 = vunpack.c.l.b16 %v132
  %v431 = vunpack.c.h.b16 %v132
  %v432 = vunpack.c.l.b16 %v133
  %v433 = vunpack.c.h.b16 %v133
  %v434 = vunpack.c.l.b16 %v134
  %v435 = vunpack.c.h.b16 %v134
  %v436 = vunpack.c.l.b16 %v135
  %v437 = vunpack.c.h.b16 %v135
  %v438 = vunpack.c.l.b16 %v136
  %v439 = vunpack.c.h.b16 %v136
  %v440 = vunpack.c.l.b16 %v137
  %v441 = vunpack.c.h.b16 %v137
  %v442 = vunpack.c.l.b16 %v138
  %v443 = vunpack.c.h.b16 %v138
  %v444 = vunpack.c.l.b16 %v139
  %v445 = vunpack.c.h.b16 %v139
  %v446 = vpack.c.b16 %v252, %v250
  %v447 = vpack.c.b16 %v253, %v251
  %v448 = vpack.c.b16 %v256, %v254
  %v449 = vpack.c.b16 %v257, %v255
  %v450 = vpack.c.b16 %v260, %v258
  %v451 = vpack.c.b16 %v261, %v259
  %v452 = vpack.c.b16 %v264, %v262
  %v453 = vpack.c.b16 %v265, %v263
  %v454 = vpack.c.b16 %v268, %v266
  %v455 = vpack.c.b16 %v269, %v267
  %v456 = vpack.c.b16 %v272, %v270
  %v457 = vpack.c.b16 %v273, %v271
  %v458 = vpack.c.b16 %v276, %v274
  %v459 = vpack.c.b16 %v277, %v275
  %v460 = vpack.c.b16 %v280, %v278
  %v461 = vpack.c.b16 %v281, %v279
  %v462 = vpack.c.b16 %v284, %v282
  %v463 = vpack.c.b16 %v285, %v283
  %v464 = vpack.c.b16 %v288, %v286
  %v465 = vpack.c.b16 %v289, %v287
  %v466 = vpack.c.b16 %v292, %v290
  %v467 = vpack.c.b16 %v293, %v291
  %v468 = vpack.c.b16 %v296, %v294
  %v469 = vpack.c.b16 %v297, %v295
  %v470 = vpack.c.b16 %v300, %v298
  %v471 = vpack.c.b16 %v301, %v299
  %v472 = vpack.c.b16 %v304, %v302
  %v473 = vpack.c.b16 %v305, %v303
  %v474 = vpack.c.b16 %v308, %v306
  %v475 = vpack.c.b16 %v309, %v307
  %v476 = vpack.c.b16 %v312, %v310
  %v477 = vpack.c.b16 %v313, %v311
  %v478 = vpack.c.b16 %v316, %v314
  %v479 = vpack.c.b16 %v317, %v315
  %v480 = vpack.c.b16 %v320, %v318
  %v481 = vpack.c.b16 %v321, %v319
  %v482 = vpack.c.b16 %v324, %v322
  %v483 = vpack.c.b16 %v325, %v323
  %v484 = vpack.c.b16 %v328, %v326
  %v485 = vpack.c.b16 %v329, %v327
  %v486 = vpack.c.b16 %v332, %v330
  %v487 = vpack.c.b16 %v333, %v331
  %v488 = vpack.c.b16 %v336, %v334
  %v489 = vpack.c.b16 %v337, %v335
  %v490 = vpack.c.b16 %v340, %v338
  %v491 = vpack.c.b16 %v341, %v339
  %v492 = vpack.c.b16 %v344, %v342
  %v493 = vpack.c.b16 %v345, %v343
  %v494 = vpack.c.b16 %v348, %v346
  %v495 = vpack.c.b16 %v349, %v347
  %v496 = vpack.c.b16 %v352, %v350
  %v497 = vpack.c.b16 %v353, %v351
  %v498 = vpack.c.b16 %v356, %v354
  %v499 = vpack.c.b16 %v357, %v355
  %v500 = vpack.c.b16 %v360, %v358
  %v501 = vpack.c.b16 %v361, %v359
  %v502 = vpack.c.b16 %v364, %v362
  %v503 = vpack.c.b16 %v365, %v363
  %v504 = vpack.c.b16 %v368, %v366
  %v505 = vpack.c.b16 %v369, %v367
  %v506 = vpack.c.b16 %v372, %v370
  %v507 = vpack.c.b16 %v373, %v371
  %v508 = vpack.c.b16 %v376, %v374
  %v509 = vpack.c.b16 %v377, %v375
  %v510 = vpack.c.b16 %v380, %v378
  %v511 = vpack.c.b16 %v381, %v379
  %v512 = vpack.c.b16 %v384, %v382
  %v513 = vpack.c.b16 %v385, %v383
  %v514 = vpack.c.b16 %v388, %v386
  %v515 = vpack.c.b16 %v389, %v387
  %v516 = vpack.c.b16 %v392, %v390
  %v517 = vpack.c.b16 %v393, %v391
  %v518 = vpack.c.b16 %v396, %v394
  %v519 = vpack.c.b16 %v397, %v395
  %v520 = vpack.c.b16 %v400, %v398
  %v521 = vpack.c.b16 %v401, %v399
  %v522 = vpack.c.b16 %v404, %v402
  %v523 = vpack.c.b16 %v405, %v403
  %v524 = vpack.c.b16 %v408, %v406
  %v525 = vpack.c.b16 %v409, %v407
  %v526 = vpack.c.b16 %v412, %v410
  %v527 = vpack.c.b16 %v413, %v411
  %v528 = vpack.c.b16 %v416, %v414
  %v529 = vpack.c.b16 %v417, %v415
  %v530 = vpack.c.b16 %v420, %v418
  %v531 = vpack.c.b16 %v421, %v419
  %v532 = vpack.c.b16 %v424, %v422
  %v533 = vpack.c.b16 %v425, %v423
  %v534 = vpack.c.b16 %v428, %v426
  %v535 = vpack.c.b16 %v429, %v427
  %v536 = vpack.c.b16 %v432, %v430
  %v537 = vpack.c.b16 %v433, %v431
  %v538 = vpack.c.b16 %v436, %v434
  %v539 = vpack.c.b16 %v437, %v435
  %v540 = vpack.c.b16 %v440, %v438
  %v541 = vpack.c.b16 %v441, %v439
  %v542 = vpack.c.b16 %v444, %v442
  %v543 = vpack.c.b16 %v445, %v443
  %vm642 = vcmask 130048
  %v644 = vsel %vm642, %v41, 0
  %646 = vmatprep.subr.bf16.mxu0 %v447
  %647 = vmatpush1.bf16.msra.mxu0 %v446
  %648 = vmatprep.subr.bf16.mxu0 %v449
  %649 = vmatpush1.bf16.msra.mxu0 %v448
  %650 = vmatprep.subr.bf16.mxu0 %v451
  %651 = vmatpush1.bf16.msra.mxu0 %v450
  %652 = vmatprep.subr.bf16.mxu0 %v453
  %653 = vmatpush1.bf16.msra.mxu0 %v452
  %654 = vmatprep.subr.bf16.mxu0 %v455
  %655 = vmatpush1.bf16.msra.mxu0 %v454
  %656 = vmatprep.subr.bf16.mxu0 %v457
  %657 = vmatpush1.bf16.msra.mxu0 %v456
  %658 = vmatprep.subr.bf16.mxu0 %v459
  %659 = vmatpush1.bf16.msra.mxu0 %v458
  %660 = vmatprep.subr.bf16.mxu0 %v461
  %661 = vmatpush1.bf16.msra.mxu0 %v460
  %662 = vmatprep.subr.bf16.mxu0 %v463
  %663 = vmatpush1.bf16.msra.mxu0 %v462
  %664 = vmatprep.subr.bf16.mxu0 %v465
  %665 = vmatpush1.bf16.msra.mxu0 %v464
  %666 = vmatprep.subr.bf16.mxu0 %v467
  %667 = vmatpush1.bf16.msra.mxu0 %v466
  %668 = vmatprep.subr.bf16.mxu0 %v469
  %669 = vmatpush1.bf16.msra.mxu0 %v468
  %670 = vmatprep.subr.bf16.mxu0 %v471
  %671 = vmatpush1.bf16.msra.mxu0 %v470
  %672 = vmatprep.subr.bf16.mxu0 %v473
  %673 = vmatpush1.bf16.msra.mxu0 %v472
  %674 = vmatprep.subr.bf16.mxu0 %v475
  %675 = vmatpush1.bf16.msra.mxu0 %v474
  %676 = vmatprep.subr.bf16.mxu0 %v477
  %677 = vmatpush1.bf16.msra.mxu0 %v476
  %678 = vmatprep.mubr.bf16.mxu0 %v36
  %679 = vmatmul.mubr.bf16.gmra.mrb[0].mxu0 %v35
  %v680 = vpop.f32.mrb[0].mxu0
  %v681 = vadd.f32 %v145, %v680
  %v682 = vpop.f32.mrb[0].mxu0
  %v683 = vadd.f32 %v149, %v682
  %v684 = vpop.f32.mrb[0].mxu0
  %v685 = vadd.f32 %v145, %v684
  %v686 = vpop.f32.mrb[0].mxu0
  %v687 = vadd.f32 %v149, %v686
  %688 = vdwg.mxu0
  %689 = vmatprep.subr.bf16.mxu0 %v479
  %690 = vmatpush1.bf16.msra.mxu0 %v478
  %691 = vmatprep.subr.bf16.mxu0 %v481
  %692 = vmatpush1.bf16.msra.mxu0 %v480
  %693 = vmatprep.subr.bf16.mxu0 %v483
  %694 = vmatpush1.bf16.msra.mxu0 %v482
  %695 = vmatprep.subr.bf16.mxu0 %v485
  %696 = vmatpush1.bf16.msra.mxu0 %v484
  %697 = vmatprep.subr.bf16.mxu0 %v487
  %698 = vmatpush1.bf16.msra.mxu0 %v486
  %699 = vmatprep.subr.bf16.mxu0 %v489
  %700 = vmatpush1.bf16.msra.mxu0 %v488
  %701 = vmatprep.subr.bf16.mxu0 %v491
  %702 = vmatpush1.bf16.msra.mxu0 %v490
  %703 = vmatprep.subr.bf16.mxu0 %v493
  %704 = vmatpush1.bf16.msra.mxu0 %v492
  %705 = vmatprep.subr.bf16.mxu0 %v495
  %706 = vmatpush1.bf16.msra.mxu0 %v494
  %707 = vmatprep.subr.bf16.mxu0 %v497
  %708 = vmatpush1.bf16.msra.mxu0 %v496
  %709 = vmatprep.subr.bf16.mxu0 %v499
  %710 = vmatpush1.bf16.msra.mxu0 %v498
  %711 = vmatprep.subr.bf16.mxu0 %v501
  %712 = vmatpush1.bf16.msra.mxu0 %v500
  %713 = vmatprep.subr.bf16.mxu0 %v503
  %714 = vmatpush1.bf16.msra.mxu0 %v502
  %715 = vmatprep.subr.bf16.mxu0 %v505
  %716 = vmatpush1.bf16.msra.mxu0 %v504
  %717 = vmatprep.subr.bf16.mxu0 %v507
  %718 = vmatpush1.bf16.msra.mxu0 %v506
  %719 = vmatprep.subr.bf16.mxu0 %v509
  %720 = vmatpush1.bf16.msra.mxu0 %v508
  %721 = vmatprep.mubr.bf16.mxu0 %v38
  %722 = vmatmul.mubr.bf16.gmra.mrb[0].mxu0 %v37
  %v723 = vpop.f32.mrb[0].mxu0
  %v724 = vadd.f32 %v681, %v723
  %v725 = vpop.f32.mrb[0].mxu0
  %v726 = vadd.f32 %v683, %v725
  %v727 = vpop.f32.mrb[0].mxu0
  %v728 = vadd.f32 %v685, %v727
  %v729 = vpop.f32.mrb[0].mxu0
  %v730 = vadd.f32 %v687, %v729
  %731 = vdwg.mxu0
  %732 = vmatprep.subr.bf16.mxu0 %v511
  %733 = vmatpush1.bf16.msra.mxu0 %v510
  %734 = vmatprep.subr.bf16.mxu0 %v513
  %735 = vmatpush1.bf16.msra.mxu0 %v512
  %736 = vmatprep.subr.bf16.mxu0 %v515
  %737 = vmatpush1.bf16.msra.mxu0 %v514
  %738 = vmatprep.subr.bf16.mxu0 %v517
  %739 = vmatpush1.bf16.msra.mxu0 %v516
  %740 = vmatprep.subr.bf16.mxu0 %v519
  %741 = vmatpush1.bf16.msra.mxu0 %v518
  %742 = vmatprep.subr.bf16.mxu0 %v521
  %743 = vmatpush1.bf16.msra.mxu0 %v520
  %744 = vmatprep.subr.bf16.mxu0 %v523
  %745 = vmatpush1.bf16.msra.mxu0 %v522
  %746 = vmatprep.subr.bf16.mxu0 %v525
  %747 = vmatpush1.bf16.msra.mxu0 %v524
  %748 = vmatprep.subr.bf16.mxu0 %v527
  %749 = vmatpush1.bf16.msra.mxu0 %v526
  %750 = vmatprep.subr.bf16.mxu0 %v529
  %751 = vmatpush1.bf16.msra.mxu0 %v528
  %752 = vmatprep.subr.bf16.mxu0 %v531
  %753 = vmatpush1.bf16.msra.mxu0 %v530
  %754 = vmatprep.subr.bf16.mxu0 %v533
  %755 = vmatpush1.bf16.msra.mxu0 %v532
  %756 = vmatprep.subr.bf16.mxu0 %v535
  %757 = vmatpush1.bf16.msra.mxu0 %v534
  %758 = vmatprep.subr.bf16.mxu0 %v537
  %759 = vmatpush1.bf16.msra.mxu0 %v536
  %760 = vmatprep.subr.bf16.mxu0 %v539
  %761 = vmatpush1.bf16.msra.mxu0 %v538
  %762 = vmatprep.subr.bf16.mxu0 %v541
  %763 = vmatpush1.bf16.msra.mxu0 %v540
  %764 = vmatprep.mubr.bf16.mxu0 %v40
  %765 = vmatmul.mubr.bf16.gmra.mrb[0].mxu0 %v39
  %v766 = vpop.f32.mrb[0].mxu0
  %v767 = vadd.f32 %v724, %v766
  %v768 = vpop.f32.mrb[0].mxu0
  %v769 = vadd.f32 %v726, %v768
  %v770 = vpop.f32.mrb[0].mxu0
  %v771 = vadd.f32 %v728, %v770
  %v772 = vpop.f32.mrb[0].mxu0
  %v773 = vadd.f32 %v730, %v772
  %774 = vdwg.mxu0
  %775 = vmatprep.subr.bf16.mxu0 %v543
  %776 = vmatpush1.bf16.msra.mxu0 %v542
  %777 = vmatprep.subr.bf16.mxu0 0
  %778 = vmatpush1.bf16.msra.mxu0 0
  %779 = vmatprep.subr.bf16.mxu0 0
  %780 = vmatpush1.bf16.msra.mxu0 0
  %781 = vmatprep.subr.bf16.mxu0 0
  %782 = vmatpush1.bf16.msra.mxu0 0
  %783 = vmatprep.subr.bf16.mxu0 0
  %784 = vmatpush1.bf16.msra.mxu0 0
  %785 = vmatprep.subr.bf16.mxu0 0
  %786 = vmatpush1.bf16.msra.mxu0 0
  %787 = vmatprep.subr.bf16.mxu0 0
  %788 = vmatpush1.bf16.msra.mxu0 0
  %789 = vmatprep.subr.bf16.mxu0 0
  %790 = vmatpush1.bf16.msra.mxu0 0
  %791 = vmatprep.subr.bf16.mxu0 0
  %792 = vmatpush1.bf16.msra.mxu0 0
  %793 = vmatprep.subr.bf16.mxu0 0
  %794 = vmatpush1.bf16.msra.mxu0 0
  %795 = vmatprep.subr.bf16.mxu0 0
  %796 = vmatpush1.bf16.msra.mxu0 0
  %797 = vmatprep.subr.bf16.mxu0 0
  %798 = vmatpush1.bf16.msra.mxu0 0
  %799 = vmatprep.subr.bf16.mxu0 0
  %800 = vmatpush1.bf16.msra.mxu0 0
  %801 = vmatprep.subr.bf16.mxu0 0
  %802 = vmatpush1.bf16.msra.mxu0 0
  %803 = vmatprep.subr.bf16.mxu0 0
  %804 = vmatpush1.bf16.msra.mxu0 0
  %805 = vmatprep.subr.bf16.mxu0 0
  %806 = vmatpush1.bf16.msra.mxu0 0
  %807 = vmatprep.mubr.bf16.mxu0 0
  %808 = vmatmul.mubr.bf16.gmra.mrb[0].mxu0 %v644
  %v809 = vpop.f32.mrb[0].mxu0
  %v810 = vadd.f32 %v767, %v809
  %v811 = vpop.f32.mrb[0].mxu0
  %v812 = vadd.f32 %v769, %v811
  %v813 = vpop.f32.mrb[0].mxu0
  %v814 = vadd.f32 %v771, %v813
  %v815 = vpop.f32.mrb[0].mxu0
  %v816 = vadd.f32 %v773, %v815
  %817 = vdwg.mxu0
  %v818 = vmax.f32 %v810, 0.0
  %v819 = vmax.f32 %v812, 0.0
  %v820 = vmax.f32 %v814, 0.0
  %v821 = vmax.f32 %v816, 0.0
  %v822 = vpack.c.bf16 %v820, %v818
  %v823 = vpack.c.bf16 %v821, %v819
  %v824 = vld [vmem:[%s3] sm:$0xf]
  %v825 = vld [vmem:[%s3 + $0x4] sm:$0xf]
  %v826 = vld [vmem:[%s3 + $0x8] sm:$0xf]
  %v827 = vld [vmem:[%s3 + $0xc] sm:$0xf]
  %v828 = vld [vmem:[%s3 + $0x10] sm:$0xf]
  %v829 = vld [vmem:[%s3 + $0x14] sm:$0xf]
  %v830 = vld [vmem:[%s3 + $0x18] sm:$0xf]
  %v831 = vld [vmem:[%s3 + $0x1c] sm:$0xf]
  %v832 = vld [vmem:[%s3 + $0x20] sm:$0xf]
  %v833 = vld [vmem:[%s3 + $0x24] sm:$0xf]
  %v834 = vld [vmem:[%s3 + $0x28] sm:$0xf]
  %v835 = vld [vmem:[%s3 + $0x2c] sm:$0xf]
  %v836 = vld [vmem:[%s3 + $0x30] sm:$0xf]
  %v837 = vld [vmem:[%s3 + $0x34] sm:$0xf]
  %v838 = vld [vmem:[%s3 + $0x38] sm:$0xf]
  %v839 = vld [vmem:[%s3 + $0x3c] sm:$0xf]
  %v840 = vld [vmem:[%s3 + $0x40] sm:$0xf]
  %v841 = vld [vmem:[%s3 + $0x44] sm:$0xf]
  %v842 = vld [vmem:[%s3 + $0x48] sm:$0xf]
  %v843 = vld [vmem:[%s3 + $0x4c] sm:$0xf]
  %v844 = vld [vmem:[%s3 + $0x50] sm:$0xf]
  %v845 = vld [vmem:[%s3 + $0x54] sm:$0xf]
  %v846 = vld [vmem:[%s3 + $0x58] sm:$0xf]
  %v847 = vld [vmem:[%s3 + $0x5c] sm:$0xf]
  %v848 = vld [vmem:[%s3 + $0x60] sm:$0xf]
  %v849 = vld [vmem:[%s3 + $0x64] sm:$0xf]
  %v850 = vld [vmem:[%s3 + $0x68] sm:$0xf]
  %v851 = vld [vmem:[%s3 + $0x6c] sm:$0xf]
  %v852 = vld [vmem:[%s3 + $0x70] sm:$0xf]
  %v853 = vld [vmem:[%s3 + $0x74] sm:$0xf]
  %v854 = vld [vmem:[%s3 + $0x78] sm:$0xf]
  %v855 = vld [vmem:[%s3 + $0x7c] sm:$0xf]
  %v856 = vld [vmem:[%s4] sm:$0x1]
  %v858 = vlaneseq
  %v859 = vshrl.u32 %v858, 7
  %v860 = vsub.s32 0, %v859
  %v861 = vrot.slane %v856, %v860
  %v895 = vunpack.c.l.b16 %v824
  %v896 = vunpack.c.l.b16 %v825
  %v897 = vunpack.c.l.b16 %v826
  %v898 = vunpack.c.l.b16 %v827
  %v899 = vunpack.c.l.b16 %v828
  %v900 = vunpack.c.l.b16 %v829
  %v901 = vunpack.c.l.b16 %v830
  %v902 = vunpack.c.l.b16 %v831
  %v903 = vunpack.c.l.b16 %v832
  %v904 = vunpack.c.l.b16 %v833
  %v905 = vunpack.c.l.b16 %v834
  %v906 = vunpack.c.l.b16 %v835
  %v907 = vunpack.c.l.b16 %v836
  %v908 = vunpack.c.l.b16 %v837
  %v909 = vunpack.c.l.b16 %v838
  %v910 = vunpack.c.l.b16 %v839
  %v911 = vunpack.c.l.b16 %v840
  %v912 = vunpack.c.l.b16 %v841
  %v913 = vunpack.c.l.b16 %v842
  %v914 = vunpack.c.l.b16 %v843
  %v915 = vunpack.c.l.b16 %v844
  %v916 = vunpack.c.l.b16 %v845
  %v917 = vunpack.c.l.b16 %v846
  %v918 = vunpack.c.l.b16 %v847
  %v919 = vunpack.c.l.b16 %v848
  %v920 = vunpack.c.l.b16 %v849
  %v921 = vunpack.c.l.b16 %v850
  %v922 = vunpack.c.l.b16 %v851
  %v923 = vunpack.c.l.b16 %v852
  %v924 = vunpack.c.l.b16 %v853
  %v925 = vunpack.c.l.b16 %v854
  %v926 = vunpack.c.l.b16 %v855
  %v927 = vpack.c.b16 %v896, %v895
  %v928 = vpack.c.b16 %v898, %v897
  %v929 = vpack.c.b16 %v900, %v899
  %v930 = vpack.c.b16 %v902, %v901
  %v931 = vpack.c.b16 %v904, %v903
  %v932 = vpack.c.b16 %v906, %v905
  %v933 = vpack.c.b16 %v908, %v907
  %v934 = vpack.c.b16 %v910, %v909
  %v935 = vpack.c.b16 %v912, %v911
  %v936 = vpack.c.b16 %v914, %v913
  %v937 = vpack.c.b16 %v916, %v915
  %v938 = vpack.c.b16 %v918, %v917
  %v939 = vpack.c.b16 %v920, %v919
  %v940 = vpack.c.b16 %v922, %v921
  %v941 = vpack.c.b16 %v924, %v923
  %v942 = vpack.c.b16 %v926, %v925
  %959 = vmatprep.subr.bf16.mxu0 0
  %960 = vmatpush1.bf16.msra.mxu0 %v927
  %961 = vmatprep.subr.bf16.mxu0 0
  %962 = vmatpush1.bf16.msra.mxu0 %v928
  %963 = vmatprep.subr.bf16.mxu0 0
  %964 = vmatpush1.bf16.msra.mxu0 %v929
  %965 = vmatprep.subr.bf16.mxu0 0
  %966 = vmatpush1.bf16.msra.mxu0 %v930
  %967 = vmatprep.subr.bf16.mxu0 0
  %968 = vmatpush1.bf16.msra.mxu0 %v931
  %969 = vmatprep.subr.bf16.mxu0 0
  %970 = vmatpush1.bf16.msra.mxu0 %v932
  %971 = vmatprep.subr.bf16.mxu0 0
  %972 = vmatpush1.bf16.msra.mxu0 %v933
  %973 = vmatprep.subr.bf16.mxu0 0
  %974 = vmatpush1.bf16.msra.mxu0 %v934
  %975 = vmatprep.subr.bf16.mxu0 0
  %976 = vmatpush1.bf16.msra.mxu0 %v935
  %977 = vmatprep.subr.bf16.mxu0 0
  %978 = vmatpush1.bf16.msra.mxu0 %v936
  %979 = vmatprep.subr.bf16.mxu0 0
  %980 = vmatpush1.bf16.msra.mxu0 %v937
  %981 = vmatprep.subr.bf16.mxu0 0
  %982 = vmatpush1.bf16.msra.mxu0 %v938
  %983 = vmatprep.subr.bf16.mxu0 0
  %984 = vmatpush1.bf16.msra.mxu0 %v939
  %985 = vmatprep.subr.bf16.mxu0 0
  %986 = vmatpush1.bf16.msra.mxu0 %v940
  %987 = vmatprep.subr.bf16.mxu0 0
  %988 = vmatpush1.bf16.msra.mxu0 %v941
  %989 = vmatprep.subr.bf16.mxu0 0
  %990 = vmatpush1.bf16.msra.mxu0 %v942
  %991 = vmatprep.mubr.bf16.mxu0 %v823
  %992 = vmatmul.mubr.bf16.gmra.mrb[0].mxu0 %v822
  %v993 = vpop.f32.mrb[0].mxu0
  %v994 = vadd.f32 %v861, %v993
  %v995 = vpop.f32.mrb[0].mxu0
  %v996 = vpop.f32.mrb[0].mxu0
  %v997 = vadd.f32 %v861, %v996
  %v998 = vpop.f32.mrb[0].mxu0
  %999 = vdwg.mxu0
  %1000 = vst [vmem:[%s5] sm:$0xff] %v994
  %1001 = vst [vmem:[%s5 + $0x8] sm:$0xff] %v997
  // Predicated region
  $region22: #{mnist_mlp_forward.1} parent=0 // pred_check
    _
  $region23: #{mnist_mlp_forward.1} parent=0 // pred_check_branch
    %1003 = sbr.rel (0) target = $region25
  $region24: #{mnist_mlp_forward.1} parent=0 // pred_region
    _
  $region25: #{mnist_mlp_forward.1} parent=0 // pred_fallthru
    _
  // Predicated region
  $region26: #{mnist_mlp_forward.1} parent=0 // pred_check
    _
  $region27: #{mnist_mlp_forward.1} parent=0 // pred_check_branch
    %1005 = sbr.rel (0) target = $region29
  $region28: #{mnist_mlp_forward.1} parent=0 // pred_region
    _
  $region29: #{mnist_mlp_forward.1} parent=0 // pred_fallthru
    _

</llo_original>
